<compile_context>
chip_gen: v6e
topology: v6e:2x2x1
jax: 0.10.0
libtpu: 0.0.40
codegen_flags: <defaults>
</compile_context>

<pallas_src>
import functools

import jax
import jax.numpy as jnp
from jax.experimental import pallas as pl
from jax.experimental.pallas import tpu as pltpu

_EPS = 1e-5  # PyTorch BatchNorm2d default


# ------------------------------ small helpers ------------------------------ #

def _round_up(x, m):
    return (x + m - 1) // m * m


def _pad2d(a, rows, cols):
    r, c = a.shape
    return jnp.pad(a, ((0, rows - r), (0, cols - c)))


# ----------------------------- Pallas kernels ------------------------------ #

def _mm_bias_act_kernel(p_ref, w_ref, b_ref, o_ref, acc_ref, *, relu):
    """acc += p @ w over K-grid; epilogue: out = act(acc + bias)."""
    k = pl.program_id(2)

    @pl.when(k == 0)
    def _init():
        acc_ref[...] = jnp.zeros_like(acc_ref)

    acc_ref[...] += jnp.dot(p_ref[...], w_ref[...],
                            preferred_element_type=jnp.float32)

    @pl.when(k == pl.num_programs(2) - 1)
    def _epilogue():
        out = acc_ref[...] + b_ref[...]
        if relu:
            out = jnp.maximum(out, 0.0)
        o_ref[...] = out.astype(o_ref.dtype)


def _mm_bias_add_relu_kernel(p_ref, w_ref, b_ref, sc_ref, o_ref, acc_ref):
    """acc += p @ w over K-grid; epilogue: out = relu(acc + bias + shortcut)."""
    k = pl.program_id(2)

    @pl.when(k == 0)
    def _init():
        acc_ref[...] = jnp.zeros_like(acc_ref)

    acc_ref[...] += jnp.dot(p_ref[...], w_ref[...],
                            preferred_element_type=jnp.float32)

    @pl.when(k == pl.num_programs(2) - 1)
    def _epilogue():
        out = acc_ref[...] + b_ref[...] + sc_ref[...].astype(jnp.float32)
        o_ref[...] = jnp.maximum(out, 0.0).astype(o_ref.dtype)


def _conv_mm(patches, weights, bias, shortcut=None, relu=True,
             out_dtype=jnp.float32):
    """Tiled MXU matmul: act((patches @ weights) + bias [+ shortcut]).

    patches : (M, K) any float dtype (cast to bf16 for the MXU)
    weights : (K, N) with BN scale already folded in
    bias    : (1, N) f32 folded BN bias
    shortcut: optional (M, N) f32 residual added in the epilogue
    Returns (M, N) out_dtype.
    """
    M, K = patches.shape
    _, N = weights.shape

    TM_MAX, TN, TK_MAX = 512, 128, 512
    tm = min(TM_MAX, _round_up(M, 8))
    tk = min(TK_MAX, _round_up(K, 128))
    tn = TN
    Mp, Kp, Np = _round_up(M, tm), _round_up(K, tk), _round_up(N, tn)

    p = _pad2d(patches, Mp, Kp).astype(jnp.bfloat16)
    w = _pad2d(weights, Kp, Np).astype(jnp.bfloat16)
    b = _pad2d(bias.reshape(1, -1).astype(jnp.float32), 1, Np)

    in_specs = [
        pl.BlockSpec((tm, tk), lambda i, j, k: (i, k)),
        pl.BlockSpec((tk, tn), lambda i, j, k: (k, j)),
        pl.BlockSpec((1, tn), lambda i, j, k: (0, j)),
    ]
    inputs = [p, w, b]

    if shortcut is not None:
        sc = _pad2d(shortcut.astype(jnp.float32), Mp, Np)
        in_specs.append(pl.BlockSpec((tm, tn), lambda i, j, k: (i, j)))
        inputs.append(sc)
        kernel = _mm_bias_add_relu_kernel
    else:
        kernel = functools.partial(_mm_bias_act_kernel, relu=relu)

    out = pl.pallas_call(
        kernel,
        out_shape=jax.ShapeDtypeStruct((Mp, Np), out_dtype),
        grid_spec=pltpu.PrefetchScalarGridSpec(
            num_scalar_prefetch=0,
            grid=(Mp // tm, Np // tn, Kp // tk),
            in_specs=in_specs,
            out_specs=pl.BlockSpec((tm, tn), lambda i, j, k: (i, j)),
            scratch_shapes=[pltpu.VMEM((tm, tn), jnp.float32)],
        ),
        compiler_params=pltpu.CompilerParams(
            dimension_semantics=("parallel", "parallel", "arbitrary")),
    )(*inputs)
    return out[:M, :N]


# ------------------------------- JAX glue ---------------------------------- #

def _im2col3x3(x_nhwc, stride):
    """3x3, pad=1 patch extraction -> (N*Ho*Wo, 9*C)."""
    n, h, w, c = x_nhwc.shape
    xp = jnp.pad(x_nhwc, ((0, 0), (1, 1), (1, 1), (0, 0)))
    ho = (h + 2 - 3) // stride + 1
    wo = (w + 2 - 3) // stride + 1
    cols = []
    for dy in range(3):
        for dx in range(3):
            sl = xp[:, dy:dy + (ho - 1) * stride + 1:stride,
                       dx:dx + (wo - 1) * stride + 1:stride, :]
            cols.append(sl)
    patches = jnp.concatenate(cols, axis=-1)          # (N, Ho, Wo, 9*C)
    return patches.reshape(n * ho * wo, 9 * c), (n, ho, wo)


def _fold_bn(bn_params):
    """Eval-mode BN -> per-channel (scale, bias), shaped (1, C)."""
    gamma, beta, mean, var = bn_params
    scale = gamma / jnp.sqrt(var + _EPS)
    bias = beta - mean * scale
    return scale.reshape(1, -1), bias.reshape(1, -1)


def mcd_basic_block_forward(x_nchw, params, stride):
    """Forward pass of MCDBasicBlock. Input/output are NCHW float32."""
    x = jnp.transpose(x_nchw, (0, 2, 3, 1))            # NHWC
    n, h, w, cin = x.shape
    planes = params['w1'].shape[0]

    # conv1 -> bn1 -> relu (BN scale folded into weights; bf16 intermediate)
    p1, (_, ho, wo) = _im2col3x3(x, stride)
    s1, b1 = _fold_bn(params['bn1'])
    w1_flat = jnp.transpose(params['w1'], (2, 3, 1, 0)).reshape(9 * cin, planes) * s1
    out1 = _conv_mm(p1, w1_flat, b1, relu=True, out_dtype=jnp.bfloat16)
    # dropout1: identity (eval)
    out1_img = out1.reshape(n, ho, wo, planes)

    # conv2 (+ bn2 + shortcut + add + relu), all fused into one tiled matmul
    p2, _ = _im2col3x3(out1_img, 1)
    s2, b2 = _fold_bn(params['bn2'])
    w2_flat = jnp.transpose(params['w2'], (2, 3, 1, 0)).reshape(9 * planes, planes) * s2
    # dropout2 / dropout3: identity (eval)

    if stride != 1 or cin != planes:
        # projection shortcut (1x1 conv + BN) fused by concatenating along K
        xs = x[:, ::stride, ::stride, :].reshape(n * ho * wo, cin)
        ssc, bsc = _fold_bn(params['bnsc'])
        wsc_flat = jnp.transpose(params['wsc'][:, :, 0, 0], (1, 0)) * ssc
        pcat = jnp.concatenate([p2, xs.astype(p2.dtype)], axis=1)
        wcat = jnp.concatenate([w2_flat, wsc_flat], axis=0)
        out = _conv_mm(pcat, wcat, b2 + bsc, relu=True)
    else:
        # identity shortcut fused as an epilogue add (kept in f32)
        sc = x.reshape(n * h * w, cin)
        out = _conv_mm(p2, w2_flat, b2, shortcut=sc, relu=True)

    out = out.reshape(n, ho, wo, planes)
    return jnp.transpose(out, (0, 3, 1, 2))             # back to NCHW


# ----------------------- deterministic parameter init ---------------------- #

def _init_bn(key, c):
    k1, k2, k3, k4 = jax.random.split(key, 4)
    gamma = 1.0 + 0.1 * jax.random.normal(k1, (c,), jnp.float32)
    beta = 0.1 * jax.random.normal(k2, (c,), jnp.float32)
    mean = 0.1 * jax.random.normal(k3, (c,), jnp.float32)
    var = jnp.abs(jax.random.normal(k4, (c,), jnp.float32)) + 0.5
    return (gamma, beta, mean, var)


def init_params(key, in_planes, planes, stride):
    ks = jax.random.split(key, 6)
    params = {
        'w1': 0.1 * jax.random.normal(ks[0], (planes, in_planes, 3, 3), jnp.float32),
        'bn1': _init_bn(ks[1], planes),
        'w2': 0.1 * jax.random.normal(ks[2], (planes, planes, 3, 3), jnp.float32),
        'bn2': _init_bn(ks[3], planes),
    }
    if stride != 1 or in_planes != planes:
        params['wsc'] = 0.1 * jax.random.normal(ks[4], (planes, in_planes, 1, 1),
                                                jnp.float32)
        params['bnsc'] = _init_bn(ks[5], planes)
    return params


# ------------------------------- reference --------------------------------- #

def reference_forward(x, params, stride):
    def bn(y, p):
        g, b, m, v = p
        inv = 1.0 / jnp.sqrt(v + _EPS)
        return (y - m[None, :, None, None]) * (g * inv)[None, :, None, None] \
            + b[None, :, None, None]

    def conv(y, w, s, pad):
        return jax.lax.conv_general_dilated(
            y, w, (s, s), [(pad, pad), (pad, pad)],
            dimension_numbers=('NCHW', 'OIHW', 'NCHW'))

    out = jax.nn.relu(bn(conv(x, params['w1'], stride, 1), params['bn1']))
    out = bn(conv(out, params['w2'], 1, 1), params['bn2'])
    in_planes, planes = x.shape[1], params['w1'].shape[0]
    if stride != 1 or in_planes != planes:
        sc = bn(conv(x, params['wsc'], stride, 0), params['bnsc'])
    else:
        sc = x
    return jax.nn.relu(out + sc)


# --------------------------------- main ------------------------------------ #

if __name__ == "__main__":
    key = jax.random.PRNGKey(0)
    kx, kp1, kp2 = jax.random.split(key, 3)

    x = jax.random.normal(kx, (2, 4, 16, 16), jnp.float32)

    # bf16 MXU inputs vs f32 reference -> loosened tolerance
    RTOL, ATOL = 5e-2, 5e-2

    # config 1: downsampling block with projection shortcut (stride=2, 4->8 ch)
    params1 = init_params(kp1, in_planes=4, planes=8, stride=2)
    out1 = jax.block_until_ready(mcd_basic_block_forward(x, params1, stride=2))
    ref1 = reference_forward(x, params1, stride=2)
    assert out1.shape == (2, 8, 8, 8)
    assert jnp.allclose(out1, ref1, rtol=RTOL, atol=ATOL), \
        float(jnp.max(jnp.abs(out1 - ref1)))

    # config 2: identity shortcut (stride=1, 4->4 ch)
    params2 = init_params(kp2, in_planes=4, planes=4, stride=1)
    out2 = jax.block_until_ready(mcd_basic_block_forward(x, params2, stride=1))
    ref2 = reference_forward(x, params2, stride=1)
    assert out2.shape == (2, 4, 16, 16)
    assert jnp.allclose(out2, ref2, rtol=RTOL, atol=ATOL), \
        float(jnp.max(jnp.abs(out2 - ref2)))

    print("KERNEL_OK")
</pallas_src>

<mosaic_0001>
module attributes {stable_mosaic.version = 11 : i64} {
  func.func @_mm_bias_act_kernel(%arg0: i32, %arg1: i32, %arg2: i32, %arg3: memref<128x128xbf16, #tpu.memory_space<vmem>>, %arg4: memref<128x128xbf16, #tpu.memory_space<vmem>>, %arg5: memref<1x128xf32, #tpu.memory_space<vmem>>, %arg6: memref<128x128xbf16, #tpu.memory_space<vmem>>, %arg7: memref<128x128xf32, #tpu.memory_space<vmem>>) attributes {dimension_semantics = [#tpu.dimension_semantics<parallel>, #tpu.dimension_semantics<parallel>, #tpu.dimension_semantics<arbitrary>], iteration_bounds = array<i64: 1, 1, 1>, scalar_prefetch = 0 : i64, scratch_operands = 1 : i64, tpu.core_type = #tpu.core_type<tc>, window_params = [{transform_indices = @transform_0, window_bounds = array<i64: 128, 128>}, {transform_indices = @transform_1, window_bounds = array<i64: 128, 128>}, {transform_indices = @transform_2, window_bounds = array<i64: 1, 128>}, {transform_indices = @transform_3, window_bounds = array<i64: 128, 128>}]} {
    %c0_i32 = arith.constant 0 : i32
    %0 = arith.cmpi eq, %arg2, %c0_i32 : i32
    %1 = arith.extui %0 : i1 to i32
    %c0_i32_0 = arith.constant 0 : i32
    %2 = arith.cmpi ne, %1, %c0_i32_0 : i32
    scf.if %2 {
      %cst_10 = arith.constant 0.000000e+00 : f32
      %12 = vector.broadcast %cst_10 : f32 to vector<128x128xf32>
      %c0_11 = arith.constant 0 : index
      %c0_12 = arith.constant 0 : index
      %13 = vector.load %arg7[%c0_11, %c0_12] : memref<128x128xf32, #tpu.memory_space<vmem>>, vector<128x128xf32>
      tpu.vector_store %arg7[%c0_11, %c0_12], %12 {strides = array<i32>} : memref<128x128xf32, #tpu.memory_space<vmem>>, vector<128x128xf32>,
    } else {
    }
    %c0 = arith.constant 0 : index
    %c0_1 = arith.constant 0 : index
    %3 = vector.load %arg7[%c0, %c0_1] : memref<128x128xf32, #tpu.memory_space<vmem>>, vector<128x128xf32>
    %c0_2 = arith.constant 0 : index
    %c0_3 = arith.constant 0 : index
    %4 = vector.load %arg3[%c0_2, %c0_3] : memref<128x128xbf16, #tpu.memory_space<vmem>>, vector<128x128xbf16>
    %c0_4 = arith.constant 0 : index
    %c0_5 = arith.constant 0 : index
    %5 = vector.load %arg4[%c0_4, %c0_5] : memref<128x128xbf16, #tpu.memory_space<vmem>>, vector<128x128xbf16>
    %cst = arith.constant dense<0.000000e+00> : vector<128x128xf32>
    %6 = tpu.matmul %4, %5, %cst {dimension_numbers = #tpu.dot_dimension_numbers<[1], [0], [0], [1], [0, 0, 1, 1], [], []>} : vector<128x128xbf16>, vector<128x128xbf16>, vector<128x128xf32> -> vector<128x128xf32>
    %7 = arith.addf %3, %6 : vector<128x128xf32>
    %c0_6 = arith.constant 0 : index
    %c0_7 = arith.constant 0 : index
    %8 = vector.load %arg7[%c0_6, %c0_7] : memref<128x128xf32, #tpu.memory_space<vmem>>, vector<128x128xf32>
    tpu.vector_store %arg7[%c0_6, %c0_7], %7 {strides = array<i32>} : memref<128x128xf32, #tpu.memory_space<vmem>>, vector<128x128xf32>,
    %c0_i32_8 = arith.constant 0 : i32
    %9 = arith.cmpi eq, %arg2, %c0_i32_8 : i32
    %10 = arith.extui %9 : i1 to i32
    %c0_i32_9 = arith.constant 0 : i32
    %11 = arith.cmpi ne, %10, %c0_i32_9 : i32
    scf.if %11 {
      %c0_10 = arith.constant 0 : index
      %c0_11 = arith.constant 0 : index
      %12 = vector.load %arg7[%c0_10, %c0_11] : memref<128x128xf32, #tpu.memory_space<vmem>>, vector<128x128xf32>
      %c0_12 = arith.constant 0 : index
      %c0_13 = arith.constant 0 : index
      %13 = vector.load %arg5[%c0_12, %c0_13] : memref<1x128xf32, #tpu.memory_space<vmem>>, vector<1x128xf32>
      %14 = vector.broadcast %13 : vector<1x128xf32> to vector<128x128xf32>
      %15 = arith.addf %12, %14 : vector<128x128xf32>
      %cst_14 = arith.constant 0.000000e+00 : f32
      %16 = vector.broadcast %cst_14 : f32 to vector<128x128xf32>
      %17 = arith.maximumf %15, %16 : vector<128x128xf32>
      %18 = arith.truncf %17 : vector<128x128xf32> to vector<128x128xbf16>
      %c0_15 = arith.constant 0 : index
      %c0_16 = arith.constant 0 : index
      %19 = vector.load %arg6[%c0_15, %c0_16] : memref<128x128xbf16, #tpu.memory_space<vmem>>, vector<128x128xbf16>
      tpu.vector_store %arg6[%c0_15, %c0_16], %18 {strides = array<i32>} : memref<128x128xbf16, #tpu.memory_space<vmem>>, vector<128x128xbf16>,
    } else {
    }
    return
  }
  func.func @transform_0(%arg0: i32, %arg1: i32, %arg2: i32) -> (i32, i32) {
    %c0_i32 = arith.constant 0 : i32
    return %arg0, %arg2 : i32, i32
  }
  func.func @transform_1(%arg0: i32, %arg1: i32, %arg2: i32) -> (i32, i32) {
    %c0_i32 = arith.constant 0 : i32
    return %arg2, %arg1 : i32, i32
  }
  func.func @transform_2(%arg0: i32, %arg1: i32, %arg2: i32) -> (i32, i32) {
    %c0_i32 = arith.constant 0 : i32
    %c0_i32_0 = arith.constant 0 : i32
    return %c0_i32, %arg1 : i32, i32
  }
  func.func @transform_3(%arg0: i32, %arg1: i32, %arg2: i32) -> (i32, i32) {
    %c0_i32 = arith.constant 0 : i32
    return %arg0, %arg1 : i32, i32
  }
}

</mosaic_0001>

<llo_original>
// kernel: tpu_custom_call.1
$region0: #{tpu_custom_call.1}
  #allocation0 [shape = 'u32[]', space=smem, size = 0x4, offset = 0x4, fixed_abs, tag = 'smem constant byte address 0x4 - core index']
  #allocation1 [shape = 'u32[144,128]{1,0:T(1,128)}', space=vmem, size = 0x12000, scoped, tag = 'internal scratch']
  #allocation2 [shape = 'f32[128,128]{1,0:T(8,128)}', space=vmem, size = 0x10000, scoped, tag = 'scratch operand']
  %s0 = inlined_call_operand.hbm [shape: bf16[128,128], index: 0, kind: input, shape index: {}]
  %s1 = inlined_call_operand.hbm [shape: bf16[128,128], index: 1, kind: input, shape index: {}]
  %s2 = inlined_call_operand.vmem [shape: f32[1,128], index: 2, kind: input, shape index: {}]
  %s3 = inlined_call_operand.hbm [shape: bf16[128,128], index: 3, kind: output, shape index: {}]
  %s4 = sld [smem:[#allocation0]]
  $region38: #{tpu_custom_call.1} parent=0
    _
  %s6 = ssub.s32 1, %s4
  %s7 = scalar_select 0, %s6, %s4
  $region1: #{tpu_custom_call.1} parent=0
    #allocation3 [shape = 'u8[32768]{0}', space=vmem, size = 0x8000, scoped, tag = 'input window, operand 0, single buffered']
    #allocation4 [shape = 's32[1]{0}', space=sflag, size = 0x4, scoped, tag = 'scoped memory for tpu_custom_call.1']
    #allocation5 [shape = 's32[1]{0}', space=sflag, size = 0x4, scoped, tag = 'scoped memory for tpu_custom_call.1']
    #allocation6 [shape = 'u8[32768]{0}', space=vmem, size = 0x8000, scoped, tag = 'input window, operand 1, single buffered']
    #allocation7 [shape = 's32[1]{0}', space=sflag, size = 0x4, scoped, tag = 'scoped memory for tpu_custom_call.1']
    #allocation8 [shape = 'u8[32768]{0}', space=vmem, size = 0x8000, scoped, tag = 'output window, operand 0, single buffered']
    %8 = vsyncpa [#allocation4], 0
    %9 = vsyncpa [#allocation7], 0
    %10 = vsyncpa [#allocation5], 0
    // Predicated region
    $region2: #{tpu_custom_call.1} parent=1 // pred_check
      _
    $region3: #{tpu_custom_call.1} parent=1 // pred_check_branch
      %12 = sbr.rel (0) target = $region5
    $region4: #{tpu_custom_call.1} parent=1 // pred_region
      %s14 = ssub.s32 1024, 1024
      %15 = vsyncadd [#allocation4], %s14
      %s16 = sshll.u32 [#allocation3], 4
      %s17 = int_to_ptr.vmem [resolvable:$true] %s16
      %22 = dma.hbm_to_vmem [thread:$0]  %s0, 1024, %s17, [#allocation4], 64, 64, 4
    $region5: #{tpu_custom_call.1} parent=1 // pred_fallthru
      _
    // Predicated region
    $region6: #{tpu_custom_call.1} parent=1 // pred_check
      _
    $region7: #{tpu_custom_call.1} parent=1 // pred_check_branch
      %24 = sbr.rel (0) target = $region9
    $region8: #{tpu_custom_call.1} parent=1 // pred_region
      %s26 = ssub.s32 1024, 1024
      %27 = vsyncadd [#allocation7], %s26
      %s28 = sshll.u32 [#allocation6], 4
      %s29 = int_to_ptr.vmem [resolvable:$true] %s28
      %34 = dma.hbm_to_vmem [thread:$0]  %s1, 1024, %s29, [#allocation7], 64, 64, 4
    $region9: #{tpu_custom_call.1} parent=1 // pred_fallthru
      _
    // Predicated region
    $region10: #{tpu_custom_call.1} parent=1 // pred_check
      _
    $region11: #{tpu_custom_call.1} parent=1 // pred_check_branch
      %36 = sbr.rel (0) target = $region13
    $region12: #{tpu_custom_call.1} parent=1 // pred_region
      _
    $region13: #{tpu_custom_call.1} parent=1 // pred_fallthru
      _
    // Predicated region
    $region14: #{tpu_custom_call.1} parent=1 // pred_check
      _
    $region15: #{tpu_custom_call.1} parent=1 // pred_check_branch
      %38 = sbr.rel (0) target = $region17
    $region16: #{tpu_custom_call.1} parent=1 // pred_region
      %39 = dma.done [#allocation4], 1024
    $region17: #{tpu_custom_call.1} parent=1 // pred_fallthru
      _
    // Predicated region
    $region18: #{tpu_custom_call.1} parent=1 // pred_check
      _
    $region19: #{tpu_custom_call.1} parent=1 // pred_check_branch
      %41 = sbr.rel (0) target = $region21
    $region20: #{tpu_custom_call.1} parent=1 // pred_region
      %42 = dma.done [#allocation7], 1024
    $region21: #{tpu_custom_call.1} parent=1 // pred_fallthru
      _
    %p44 = scmp.eq.s32.totalorder 0, 0
    // Predicated region
    $region22: #{tpu_custom_call.1} parent=1 // pred_check
      %p45 = pneg %p44
    $region23: #{tpu_custom_call.1} parent=1 // pred_check_branch
      %47 = sbr.rel (%p45) target = $region25
    $region24: #{tpu_custom_call.1} parent=1 // pred_region
      %48 = vst [vmem:[#allocation2] sm:$0xff] 0.0
      %49 = vst [vmem:[#allocation2 + $0x8] sm:$0xff] 0.0
      %50 = vst [vmem:[#allocation2 + $0x10] sm:$0xff] 0.0
      %51 = vst [vmem:[#allocation2 + $0x18] sm:$0xff] 0.0
      %52 = vst [vmem:[#allocation2 + $0x20] sm:$0xff] 0.0
      %53 = vst [vmem:[#allocation2 + $0x28] sm:$0xff] 0.0
      %54 = vst [vmem:[#allocation2 + $0x30] sm:$0xff] 0.0
      %55 = vst [vmem:[#allocation2 + $0x38] sm:$0xff] 0.0
      %56 = vst [vmem:[#allocation2 + $0x40] sm:$0xff] 0.0
      %57 = vst [vmem:[#allocation2 + $0x48] sm:$0xff] 0.0
      %58 = vst [vmem:[#allocation2 + $0x50] sm:$0xff] 0.0
      %59 = vst [vmem:[#allocation2 + $0x58] sm:$0xff] 0.0
      %60 = vst [vmem:[#allocation2 + $0x60] sm:$0xff] 0.0
      %61 = vst [vmem:[#allocation2 + $0x68] sm:$0xff] 0.0
      %62 = vst [vmem:[#allocation2 + $0x70] sm:$0xff] 0.0
      %63 = vst [vmem:[#allocation2 + $0x78] sm:$0xff] 0.0
    $region25: #{tpu_custom_call.1} parent=1 // pred_fallthru
      _
    %v64 = vld [vmem:[#allocation2] sm:$0xff]
    %v65 = vld [vmem:[#allocation2 + $0x8] sm:$0xff]
    %v66 = vld [vmem:[#allocation2 + $0x10] sm:$0xff]
    %v67 = vld [vmem:[#allocation2 + $0x18] sm:$0xff]
    %v68 = vld [vmem:[#allocation2 + $0x20] sm:$0xff]
    %v69 = vld [vmem:[#allocation2 + $0x28] sm:$0xff]
    %v70 = vld [vmem:[#allocation2 + $0x30] sm:$0xff]
    %v71 = vld [vmem:[#allocation2 + $0x38] sm:$0xff]
    %v72 = vld [vmem:[#allocation2 + $0x40] sm:$0xff]
    %v73 = vld [vmem:[#allocation2 + $0x48] sm:$0xff]
    %v74 = vld [vmem:[#allocation2 + $0x50] sm:$0xff]
    %v75 = vld [vmem:[#allocation2 + $0x58] sm:$0xff]
    %v76 = vld [vmem:[#allocation2 + $0x60] sm:$0xff]
    %v77 = vld [vmem:[#allocation2 + $0x68] sm:$0xff]
    %v78 = vld [vmem:[#allocation2 + $0x70] sm:$0xff]
    %v79 = vld [vmem:[#allocation2 + $0x78] sm:$0xff]
    %v80 = vld [vmem:[#allocation3] sm:$0xf]
    %v81 = vld [vmem:[#allocation3 + $0x4] sm:$0xf]
    %v82 = vld [vmem:[#allocation3 + $0x8] sm:$0xf]
    %v83 = vld [vmem:[#allocation3 + $0xc] sm:$0xf]
    %v84 = vld [vmem:[#allocation3 + $0x10] sm:$0xf]
    %v85 = vld [vmem:[#allocation3 + $0x14] sm:$0xf]
    %v86 = vld [vmem:[#allocation3 + $0x18] sm:$0xf]
    %v87 = vld [vmem:[#allocation3 + $0x1c] sm:$0xf]
    %v88 = vld [vmem:[#allocation3 + $0x20] sm:$0xf]
    %v89 = vld [vmem:[#allocation3 + $0x24] sm:$0xf]
    %v90 = vld [vmem:[#allocation3 + $0x28] sm:$0xf]
    %v91 = vld [vmem:[#allocation3 + $0x2c] sm:$0xf]
    %v92 = vld [vmem:[#allocation3 + $0x30] sm:$0xf]
    %v93 = vld [vmem:[#allocation3 + $0x34] sm:$0xf]
    %v94 = vld [vmem:[#allocation3 + $0x38] sm:$0xf]
    %v95 = vld [vmem:[#allocation3 + $0x3c] sm:$0xf]
    %v96 = vld [vmem:[#allocation6] sm:$0xf]
    %v97 = vld [vmem:[#allocation6 + $0x4] sm:$0xf]
    %v98 = vld [vmem:[#allocation6 + $0x8] sm:$0xf]
    %v99 = vld [vmem:[#allocation6 + $0xc] sm:$0xf]
    %v100 = vld [vmem:[#allocation6 + $0x10] sm:$0xf]
    %v101 = vld [vmem:[#allocation6 + $0x14] sm:$0xf]
    %v102 = vld [vmem:[#allocation6 + $0x18] sm:$0xf]
    %v103 = vld [vmem:[#allocation6 + $0x1c] sm:$0xf]
    %v104 = vld [vmem:[#allocation6 + $0x20] sm:$0xf]
    %v105 = vld [vmem:[#allocation6 + $0x24] sm:$0xf]
    %v106 = vld [vmem:[#allocation6 + $0x28] sm:$0xf]
    %v107 = vld [vmem:[#allocation6 + $0x2c] sm:$0xf]
    %v108 = vld [vmem:[#allocation6 + $0x30] sm:$0xf]
    %v109 = vld [vmem:[#allocation6 + $0x34] sm:$0xf]
    %v110 = vld [vmem:[#allocation6 + $0x38] sm:$0xf]
    %v111 = vld [vmem:[#allocation6 + $0x3c] sm:$0xf]
    %v128 = vunpack.c.l.b16 %v80
    %v129 = vunpack.c.l.b16 %v81
    %v130 = vunpack.c.l.b16 %v82
    %v131 = vunpack.c.l.b16 %v83
    %v132 = vunpack.c.l.b16 %v84
    %v133 = vunpack.c.l.b16 %v85
    %v134 = vunpack.c.l.b16 %v86
    %v135 = vunpack.c.l.b16 %v87
    %v136 = vunpack.c.l.b16 %v88
    %v137 = vunpack.c.l.b16 %v89
    %v138 = vunpack.c.l.b16 %v90
    %v139 = vunpack.c.l.b16 %v91
    %v140 = vunpack.c.l.b16 %v92
    %v141 = vunpack.c.l.b16 %v93
    %v142 = vunpack.c.l.b16 %v94
    %v143 = vunpack.c.l.b16 %v95
    %v144 = vpack.c.b16 %v129, %v128
    %v145 = vpack.c.b16 %v131, %v130
    %v146 = vpack.c.b16 %v133, %v132
    %v147 = vpack.c.b16 %v135, %v134
    %v148 = vpack.c.b16 %v137, %v136
    %v149 = vpack.c.b16 %v139, %v138
    %v150 = vpack.c.b16 %v141, %v140
    %v151 = vpack.c.b16 %v143, %v142
    %v176 = vunpack.c.l.b16 %v96
    %v177 = vunpack.c.l.b16 %v97
    %v178 = vunpack.c.l.b16 %v98
    %v179 = vunpack.c.l.b16 %v99
    %v180 = vunpack.c.l.b16 %v100
    %v181 = vunpack.c.l.b16 %v101
    %v182 = vunpack.c.l.b16 %v102
    %v183 = vunpack.c.l.b16 %v103
    %v184 = vunpack.c.l.b16 %v104
    %v185 = vunpack.c.l.b16 %v105
    %v186 = vunpack.c.l.b16 %v106
    %v187 = vunpack.c.l.b16 %v107
    %v188 = vunpack.c.l.b16 %v108
    %v189 = vunpack.c.l.b16 %v109
    %v190 = vunpack.c.l.b16 %v110
    %v191 = vunpack.c.l.b16 %v111
    %v192 = vpack.c.b16 %v177, %v176
    %v193 = vpack.c.b16 %v179, %v178
    %v194 = vpack.c.b16 %v181, %v180
    %v195 = vpack.c.b16 %v183, %v182
    %v196 = vpack.c.b16 %v185, %v184
    %v197 = vpack.c.b16 %v187, %v186
    %v198 = vpack.c.b16 %v189, %v188
    %v199 = vpack.c.b16 %v191, %v190
    %208 = vmatprep.subr.bf16.mxu0 0
    %209 = vmatpush1.bf16.msra.mxu0 %v199
    %210 = vmatprep.subr.bf16.mxu0 0
    %211 = vmatpush1.bf16.msra.mxu0 %v198
    %212 = vmatprep.subr.bf16.mxu0 0
    %213 = vmatpush1.bf16.msra.mxu0 %v197
    %214 = vmatprep.subr.bf16.mxu0 0
    %215 = vmatpush1.bf16.msra.mxu0 %v196
    %216 = vmatprep.subr.bf16.mxu0 0
    %217 = vmatpush1.bf16.msra.mxu0 %v195
    %218 = vmatprep.subr.bf16.mxu0 0
    %219 = vmatpush1.bf16.msra.mxu0 %v194
    %220 = vmatprep.subr.bf16.mxu0 0
    %221 = vmatpush1.bf16.msra.mxu0 %v193
    %222 = vmatprep.subr.bf16.mxu0 0
    %223 = vmatpush1.bf16.msra.mxu0 %v192
    %224 = vmatprep.subr.bf16.mxu0 0
    %225 = vmatpush2.bf16.msra.mxu0 0
    %226 = vmatprep.subr.bf16.mxu0 0
    %227 = vmatpush2.bf16.msra.mxu0 0
    %228 = vmatprep.subr.bf16.mxu0 0
    %229 = vmatpush2.bf16.msra.mxu0 0
    %230 = vmatprep.subr.bf16.mxu0 0
    %231 = vmatpush2.bf16.msra.mxu0 0
    %232 = vmatprep.subr.bf16.mxu0 0
    %233 = vmatpush2.bf16.msra.mxu0 0
    %234 = vmatprep.subr.bf16.mxu0 0
    %235 = vmatpush2.bf16.msra.mxu0 0
    %236 = vmatprep.subr.bf16.mxu0 0
    %237 = vmatpush2.bf16.msra.mxu0 0
    %238 = vmatprep.subr.bf16.mxu0 0
    %239 = vmatpush2.bf16.msra.mxu0 0
    %240 = vmatprep.mubr.bf16.mxu0 0
    %241 = vmatmul.mubr.bf16.gmra.mxu0 %v144
    %v242 = vpop.f32.mrf.mxu0
    %v243 = vadd.f32 0.0, %v242
    %v244 = vpop.f32.mrf.mxu0
    %v245 = vpop.f32.mrf.mxu0
    %v246 = vadd.f32 0.0, %v245
    %v247 = vpop.f32.mrf.mxu0
    %248 = vmatprep.mubr.bf16.mxu0 0
    %249 = vmatmul.mubr.bf16.gmra.mxu0 %v145
    %v250 = vpop.f32.mrf.mxu0
    %v251 = vadd.f32 0.0, %v250
    %v252 = vpop.f32.mrf.mxu0
    %v253 = vpop.f32.mrf.mxu0
    %v254 = vadd.f32 0.0, %v253
    %v255 = vpop.f32.mrf.mxu0
    %256 = vmatprep.mubr.bf16.mxu0 0
    %257 = vmatmul.mubr.bf16.gmra.mxu0 %v146
    %v258 = vpop.f32.mrf.mxu0
    %v259 = vadd.f32 0.0, %v258
    %v260 = vpop.f32.mrf.mxu0
    %v261 = vpop.f32.mrf.mxu0
    %v262 = vadd.f32 0.0, %v261
    %v263 = vpop.f32.mrf.mxu0
    %264 = vmatprep.mubr.bf16.mxu0 0
    %265 = vmatmul.mubr.bf16.gmra.mxu0 %v147
    %v266 = vpop.f32.mrf.mxu0
    %v267 = vadd.f32 0.0, %v266
    %v268 = vpop.f32.mrf.mxu0
    %v269 = vpop.f32.mrf.mxu0
    %v270 = vadd.f32 0.0, %v269
    %v271 = vpop.f32.mrf.mxu0
    %272 = vmatprep.mubr.bf16.mxu0 0
    %273 = vmatmul.mubr.bf16.gmra.mxu0 %v148
    %v274 = vpop.f32.mrf.mxu0
    %v275 = vadd.f32 0.0, %v274
    %v276 = vpop.f32.mrf.mxu0
    %v277 = vpop.f32.mrf.mxu0
    %v278 = vadd.f32 0.0, %v277
    %v279 = vpop.f32.mrf.mxu0
    %280 = vmatprep.mubr.bf16.mxu0 0
    %281 = vmatmul.mubr.bf16.gmra.mxu0 %v149
    %v282 = vpop.f32.mrf.mxu0
    %v283 = vadd.f32 0.0, %v282
    %v284 = vpop.f32.mrf.mxu0
    %v285 = vpop.f32.mrf.mxu0
    %v286 = vadd.f32 0.0, %v285
    %v287 = vpop.f32.mrf.mxu0
    %288 = vmatprep.mubr.bf16.mxu0 0
    %289 = vmatmul.mubr.bf16.gmra.mxu0 %v150
    %v290 = vpop.f32.mrf.mxu0
    %v291 = vadd.f32 0.0, %v290
    %v292 = vpop.f32.mrf.mxu0
    %v293 = vpop.f32.mrf.mxu0
    %v294 = vadd.f32 0.0, %v293
    %v295 = vpop.f32.mrf.mxu0
    %296 = vmatprep.mubr.bf16.mxu0 0
    %297 = vmatmul.mubr.bf16.gmra.mxu0 %v151
    %v298 = vpop.f32.mrf.mxu0
    %v299 = vadd.f32 0.0, %v298
    %v300 = vpop.f32.mrf.mxu0
    %v301 = vpop.f32.mrf.mxu0
    %v302 = vadd.f32 0.0, %v301
    %v303 = vpop.f32.mrf.mxu0
    %304 = vdwg.mxu0
    %v305 = vadd.f32 %v64, %v243
    %v306 = vadd.f32 %v65, %v246
    %v307 = vadd.f32 %v66, %v251
    %v308 = vadd.f32 %v67, %v254
    %v309 = vadd.f32 %v68, %v259
    %v310 = vadd.f32 %v69, %v262
    %v311 = vadd.f32 %v70, %v267
    %v312 = vadd.f32 %v71, %v270
    %v313 = vadd.f32 %v72, %v275
    %v314 = vadd.f32 %v73, %v278
    %v315 = vadd.f32 %v74, %v283
    %v316 = vadd.f32 %v75, %v286
    %v317 = vadd.f32 %v76, %v291
    %v318 = vadd.f32 %v77, %v294
    %v319 = vadd.f32 %v78, %v299
    %v320 = vadd.f32 %v79, %v302
    %321 = vst [vmem:[#allocation2] sm:$0xff] %v305
    %322 = vst [vmem:[#allocation2 + $0x8] sm:$0xff] %v306
    %323 = vst [vmem:[#allocation2 + $0x10] sm:$0xff] %v307
    %324 = vst [vmem:[#allocation2 + $0x18] sm:$0xff] %v308
    %325 = vst [vmem:[#allocation2 + $0x20] sm:$0xff] %v309
    %326 = vst [vmem:[#allocation2 + $0x28] sm:$0xff] %v310
    %327 = vst [vmem:[#allocation2 + $0x30] sm:$0xff] %v311
    %328 = vst [vmem:[#allocation2 + $0x38] sm:$0xff] %v312
    %329 = vst [vmem:[#allocation2 + $0x40] sm:$0xff] %v313
    %330 = vst [vmem:[#allocation2 + $0x48] sm:$0xff] %v314
    %331 = vst [vmem:[#allocation2 + $0x50] sm:$0xff] %v315
    %332 = vst [vmem:[#allocation2 + $0x58] sm:$0xff] %v316
    %333 = vst [vmem:[#allocation2 + $0x60] sm:$0xff] %v317
    %334 = vst [vmem:[#allocation2 + $0x68] sm:$0xff] %v318
    %335 = vst [vmem:[#allocation2 + $0x70] sm:$0xff] %v319
    %336 = vst [vmem:[#allocation2 + $0x78] sm:$0xff] %v320
    // Predicated region
    $region26: #{tpu_custom_call.1} parent=1 // pred_check
      %p337 = pneg %p44
    $region27: #{tpu_custom_call.1} parent=1 // pred_check_branch
      %339 = sbr.rel (%p337) target = $region29
    $region28: #{tpu_custom_call.1} parent=1 // pred_region
      %v340 = vld [vmem:[#allocation2] sm:$0xff]
      %v341 = vld [vmem:[#allocation2 + $0x8] sm:$0xff]
      %v342 = vld [vmem:[#allocation2 + $0x10] sm:$0xff]
      %v343 = vld [vmem:[#allocation2 + $0x18] sm:$0xff]
      %v344 = vld [vmem:[#allocation2 + $0x20] sm:$0xff]
      %v345 = vld [vmem:[#allocation2 + $0x28] sm:$0xff]
      %v346 = vld [vmem:[#allocation2 + $0x30] sm:$0xff]
      %v347 = vld [vmem:[#allocation2 + $0x38] sm:$0xff]
      %v348 = vld [vmem:[#allocation2 + $0x40] sm:$0xff]
      %v349 = vld [vmem:[#allocation2 + $0x48] sm:$0xff]
      %v350 = vld [vmem:[#allocation2 + $0x50] sm:$0xff]
      %v351 = vld [vmem:[#allocation2 + $0x58] sm:$0xff]
      %v352 = vld [vmem:[#allocation2 + $0x60] sm:$0xff]
      %v353 = vld [vmem:[#allocation2 + $0x68] sm:$0xff]
      %v354 = vld [vmem:[#allocation2 + $0x70] sm:$0xff]
      %v355 = vld [vmem:[#allocation2 + $0x78] sm:$0xff]
      %v356 = vld [vmem:[%s2] sm:$0x1]
      %v358 = vlaneseq
      %v359 = vshrl.u32 %v358, 7
      %v360 = vsub.s32 0, %v359
      %v361 = vrot.slane %v356, %v360
      %v363 = vadd.f32 %v340, %v361
      %v364 = vadd.f32 %v341, %v361
      %v365 = vadd.f32 %v342, %v361
      %v366 = vadd.f32 %v343, %v361
      %v367 = vadd.f32 %v344, %v361
      %v368 = vadd.f32 %v345, %v361
      %v369 = vadd.f32 %v346, %v361
      %v370 = vadd.f32 %v347, %v361
      %v371 = vadd.f32 %v348, %v361
      %v372 = vadd.f32 %v349, %v361
      %v373 = vadd.f32 %v350, %v361
      %v374 = vadd.f32 %v351, %v361
      %v375 = vadd.f32 %v352, %v361
      %v376 = vadd.f32 %v353, %v361
      %v377 = vadd.f32 %v354, %v361
      %v378 = vadd.f32 %v355, %v361
      %v379 = vmax.f32 %v363, 0.0
      %v380 = vmax.f32 %v364, 0.0
      %v381 = vmax.f32 %v365, 0.0
      %v382 = vmax.f32 %v366, 0.0
      %v383 = vmax.f32 %v367, 0.0
      %v384 = vmax.f32 %v368, 0.0
      %v385 = vmax.f32 %v369, 0.0
      %v386 = vmax.f32 %v370, 0.0
      %v387 = vmax.f32 %v371, 0.0
      %v388 = vmax.f32 %v372, 0.0
      %v389 = vmax.f32 %v373, 0.0
      %v390 = vmax.f32 %v374, 0.0
      %v391 = vmax.f32 %v375, 0.0
      %v392 = vmax.f32 %v376, 0.0
      %v393 = vmax.f32 %v377, 0.0
      %v394 = vmax.f32 %v378, 0.0
      %v395 = vpack.c.bf16 %v380, %v379
      %v396 = vpack.c.bf16 %v382, %v381
      %v397 = vpack.c.bf16 %v384, %v383
      %v398 = vpack.c.bf16 %v386, %v385
      %v399 = vpack.c.bf16 %v388, %v387
      %v400 = vpack.c.bf16 %v390, %v389
      %v401 = vpack.c.bf16 %v392, %v391
      %v402 = vpack.c.bf16 %v394, %v393
      %v411 = vunpack.c.l.b16 %v395
      %v412 = vunpack.c.h.b16 %v395
      %v413 = vunpack.c.l.b16 %v396
      %v414 = vunpack.c.h.b16 %v396
      %v415 = vunpack.c.l.b16 %v397
      %v416 = vunpack.c.h.b16 %v397
      %v417 = vunpack.c.l.b16 %v398
      %v418 = vunpack.c.h.b16 %v398
      %v419 = vunpack.c.l.b16 %v399
      %v420 = vunpack.c.h.b16 %v399
      %v421 = vunpack.c.l.b16 %v400
      %v422 = vunpack.c.h.b16 %v400
      %v423 = vunpack.c.l.b16 %v401
      %v424 = vunpack.c.h.b16 %v401
      %v425 = vunpack.c.l.b16 %v402
      %v426 = vunpack.c.h.b16 %v402
      %v427 = vpack.c.b16 %v411, %v411
      %v428 = vpack.c.b16 %v412, %v412
      %v429 = vpack.c.b16 %v413, %v413
      %v430 = vpack.c.b16 %v414, %v414
      %v431 = vpack.c.b16 %v415, %v415
      %v432 = vpack.c.b16 %v416, %v416
      %v433 = vpack.c.b16 %v417, %v417
      %v434 = vpack.c.b16 %v418, %v418
      %v435 = vpack.c.b16 %v419, %v419
      %v436 = vpack.c.b16 %v420, %v420
      %v437 = vpack.c.b16 %v421, %v421
      %v438 = vpack.c.b16 %v422, %v422
      %v439 = vpack.c.b16 %v423, %v423
      %v440 = vpack.c.b16 %v424, %v424
      %v441 = vpack.c.b16 %v425, %v425
      %v442 = vpack.c.b16 %v426, %v426
      %459 = vst [vmem:[#allocation8] sm:$0xf] %v427
      %460 = vst [vmem:[#allocation8 + $0x4] sm:$0xf] %v428
      %461 = vst [vmem:[#allocation8 + $0x8] sm:$0xf] %v429
      %462 = vst [vmem:[#allocation8 + $0xc] sm:$0xf] %v430
      %463 = vst [vmem:[#allocation8 + $0x10] sm:$0xf] %v431
      %464 = vst [vmem:[#allocation8 + $0x14] sm:$0xf] %v432
      %465 = vst [vmem:[#allocation8 + $0x18] sm:$0xf] %v433
      %466 = vst [vmem:[#allocation8 + $0x1c] sm:$0xf] %v434
      %467 = vst [vmem:[#allocation8 + $0x20] sm:$0xf] %v435
      %468 = vst [vmem:[#allocation8 + $0x24] sm:$0xf] %v436
      %469 = vst [vmem:[#allocation8 + $0x28] sm:$0xf] %v437
      %470 = vst [vmem:[#allocation8 + $0x2c] sm:$0xf] %v438
      %471 = vst [vmem:[#allocation8 + $0x30] sm:$0xf] %v439
      %472 = vst [vmem:[#allocation8 + $0x34] sm:$0xf] %v440
      %473 = vst [vmem:[#allocation8 + $0x38] sm:$0xf] %v441
      %474 = vst [vmem:[#allocation8 + $0x3c] sm:$0xf] %v442
    $region29: #{tpu_custom_call.1} parent=1 // pred_fallthru
      _
    // Predicated region
    $region30: #{tpu_custom_call.1} parent=1 // pred_check
      _
    $region31: #{tpu_custom_call.1} parent=1 // pred_check_branch
      %476 = sbr.rel (0) target = $region33
    $region32: #{tpu_custom_call.1} parent=1 // pred_region
      %s478 = ssub.s32 1024, 1024
      %479 = vsyncadd [#allocation5], %s478
      %s480 = sshll.u32 [#allocation8], 4
      %s481 = int_to_ptr.vmem [resolvable:$true] %s480
      %486 = dma.vmem_to_hbm [thread:$0]  %s481, 1024, %s3, [#allocation5], 64, 64, 4
    $region33: #{tpu_custom_call.1} parent=1 // pred_fallthru
      _
    // Predicated region
    $region34: #{tpu_custom_call.1} parent=1 // pred_check
      _
    $region35: #{tpu_custom_call.1} parent=1 // pred_check_branch
      %488 = sbr.rel (0) target = $region37
    $region36: #{tpu_custom_call.1} parent=1 // pred_region
      %489 = dma.done [#allocation5], 1024
    $region37: #{tpu_custom_call.1} parent=1 // pred_fallthru
      _
    %490 = vsyncpa [#allocation4], 1
    %491 = vsyncpa [#allocation7], 1
    %492 = vsyncpa [#allocation5], 1

</llo_original>
